<compile_context>
chip_gen: v7x
topology: tpu7x:2x2x1
jax: 0.10.0
libtpu: 0.0.40
codegen_flags: <defaults>
</compile_context>

<pallas_src>
import jax
import jax.numpy as jnp
from jax.experimental import pallas as pl
from jax.experimental.pallas import tpu as pltpu


def deepant_kernel(x_ref, w1_ref, b1_ref, w2_ref, b2_ref,
                   w3_ref, b3_ref, w4_ref, b4_ref, o_ref):
    x = x_ref[...]  # (SEQ_LEN, TB) -- batch on lanes

    # convblock1: Conv1d(SEQ_LEN->16, k=1) + ReLU + MaxPool1d(1) (identity)
    h1 = jnp.dot(w1_ref[...], x, preferred_element_type=jnp.float32) + b1_ref[...]
    h1 = jnp.maximum(h1, 0.0)                       # (16, TB)

    # convblock2: Conv1d(16->16, k=1) + ReLU + MaxPool1d(1) (identity)
    h2 = jnp.dot(w2_ref[...], h1, preferred_element_type=jnp.float32) + b2_ref[...]
    h2 = jnp.maximum(h2, 0.0)                       # (16, TB)

    # flatten is a no-op for (B, 16, 1) -> (B, 16)

    # denseblock: Linear(16->40) + ReLU + Dropout(p=0.25)
    # TODO(synk): Dropout is identity here (eval-mode semantics); training-mode
    # random masking not implemented.
    h3 = jnp.dot(w3_ref[...], h2, preferred_element_type=jnp.float32) + b3_ref[...]
    h3 = jnp.maximum(h3, 0.0)                       # (40, TB)

    # out: Linear(40 -> OUT_DIMENSION)
    o = jnp.dot(w4_ref[...], h3, preferred_element_type=jnp.float32) + b4_ref[...]
    o_ref[...] = o.astype(o_ref.dtype)              # (OUT_DIM, TB)


def _round_up(x, m):
    return ((x + m - 1) // m) * m


def deepant_forward(x_ncl, params, block_b=512):
    """x_ncl: (B, SEQ_LEN, 1) float32, matching PyTorch NCL conv input."""
    B, SEQ_LEN, L = x_ncl.shape
    assert L == 1, "DeepAnT with Linear(16,.) after flatten implies spatial length 1"

    w1, b1, w2, b2, w3, b3, w4, b4 = params
    out_dim = w4.shape[0]

    # Batch on the lane dimension: (SEQ_LEN, B), padded to a multiple of the
    # batch tile (tile is a multiple of 128 lanes -> unmasked stores).
    x_t = jnp.transpose(x_ncl[:, :, 0])             # (SEQ_LEN, B)
    b_pad = _round_up(B, 128)
    tb = min(block_b, b_pad)
    tb = _round_up(tb, 128)
    b_pad = _round_up(b_pad, tb)
    if b_pad != B:
        x_t = jnp.pad(x_t, ((0, 0), (0, b_pad - B)))

    grid = (pl.cdiv(b_pad, tb),)

    batch_map = lambda i: (0, i)    # tile along lanes (batch)
    const_map = lambda i: (0, 0)    # weights/biases resident across grid steps

    weight_bytes = 4 * sum(int(p.size) for p in (w1, b1, w2, b2, w3, b3, w4, b4))
    cost = pl.CostEstimate(
        flops=2 * b_pad * (SEQ_LEN * 16 + 16 * 16 + 16 * 40 + 40 * out_dim),
        transcendentals=0,
        bytes_accessed=4 * b_pad * (SEQ_LEN + out_dim) + weight_bytes,
    )

    out_t = pl.pallas_call(
        deepant_kernel,
        out_shape=jax.ShapeDtypeStruct((out_dim, b_pad), jnp.float32),
        grid=grid,
        in_specs=[
            pl.BlockSpec((SEQ_LEN, tb), batch_map),   # x tile (lane-dense)
            pl.BlockSpec(w1.shape, const_map),
            pl.BlockSpec(b1.shape, const_map),
            pl.BlockSpec(w2.shape, const_map),
            pl.BlockSpec(b2.shape, const_map),
            pl.BlockSpec(w3.shape, const_map),
            pl.BlockSpec(b3.shape, const_map),
            pl.BlockSpec(w4.shape, const_map),
            pl.BlockSpec(b4.shape, const_map),
        ],
        out_specs=pl.BlockSpec((out_dim, tb), batch_map),
        compiler_params=pltpu.CompilerParams(
            dimension_semantics=("parallel",),        # megacore on v7x
            vmem_limit_bytes=32 * 1024 * 1024,        # headroom within v7x 64 MiB
        ),
        cost_estimate=cost,
    )(x_t, w1, b1, w2, b2, w3, b3, w4, b4)

    return jnp.transpose(out_t[:, :B])                # (B, OUT_DIM)


def make_params(key, seq_len, out_dim):
    """Deterministic synthetic parameters, PyTorch-equivalent shapes:
       conv1.w (16, SEQ_LEN, 1), conv1.b (16,)
       conv2.w (16, 16, 1),      conv2.b (16,)
       fc1.w   (40, 16),         fc1.b   (40,)
       out.w   (OUT_DIM, 40),    out.b   (OUT_DIM,)
    Kept in PyTorch-native (N_out, K) layout for the W @ x kernel dataflow;
    biases reshaped to (N, 1) columns."""
    ks = jax.random.split(key, 8)
    conv1_w = jax.random.normal(ks[0], (16, seq_len, 1), jnp.float32) * 0.1
    conv1_b = jax.random.normal(ks[1], (16,), jnp.float32) * 0.1
    conv2_w = jax.random.normal(ks[2], (16, 16, 1), jnp.float32) * 0.1
    conv2_b = jax.random.normal(ks[3], (16,), jnp.float32) * 0.1
    fc1_w = jax.random.normal(ks[4], (40, 16), jnp.float32) * 0.1
    fc1_b = jax.random.normal(ks[5], (40,), jnp.float32) * 0.1
    out_w = jax.random.normal(ks[6], (out_dim, 40), jnp.float32) * 0.1
    out_b = jax.random.normal(ks[7], (out_dim,), jnp.float32) * 0.1

    w1 = conv1_w[:, :, 0]            # (16, SEQ_LEN)
    b1 = conv1_b.reshape(16, 1)
    w2 = conv2_w[:, :, 0]            # (16, 16)
    b2 = conv2_b.reshape(16, 1)
    w3 = fc1_w                       # (40, 16)
    b3 = fc1_b.reshape(40, 1)
    w4 = out_w                       # (OUT_DIM, 40)
    b4 = out_b.reshape(out_dim, 1)
    return (w1, b1, w2, b2, w3, b3, w4, b4)


def deepant_reference(x_ncl, params):
    """Pure-JAX reference of the same forward (eval-mode dropout)."""
    w1, b1, w2, b2, w3, b3, w4, b4 = params
    x = x_ncl[:, :, 0]                               # (B, SEQ_LEN)
    h1 = jnp.maximum(x @ w1.T + b1[:, 0], 0.0)
    h2 = jnp.maximum(h1 @ w2.T + b2[:, 0], 0.0)
    h3 = jnp.maximum(h2 @ w3.T + b3[:, 0], 0.0)
    return h3 @ w4.T + b4[:, 0]


if __name__ == "__main__":
    SEQ_LEN, OUT_DIM = 8, 4
    key = jax.random.PRNGKey(0)
    kx, kp, kx2 = jax.random.split(key, 3)
    params = make_params(kp, SEQ_LEN, OUT_DIM)

    # Small batch (ragged: padded up to one 128-lane tile).
    B = 4
    x = jax.random.normal(kx, (B, SEQ_LEN, 1), jnp.float32)
    y = jax.block_until_ready(deepant_forward(x, params))
    y_ref = deepant_reference(x, params)
    assert y.shape == (B, OUT_DIM)
    assert jnp.allclose(y, y_ref, atol=1e-5, rtol=1e-5), "mismatch vs reference (B=4)"

    # Larger ragged batch exercising multiple pipelined grid steps.
    B2 = 300
    x2 = jax.random.normal(kx2, (B2, SEQ_LEN, 1), jnp.float32)
    y2 = jax.block_until_ready(deepant_forward(x2, params, block_b=128))
    y2_ref = deepant_reference(x2, params)
    assert y2.shape == (B2, OUT_DIM)
    assert jnp.allclose(y2, y2_ref, atol=1e-5, rtol=1e-5), "mismatch vs reference (B=300)"

    print("KERNEL_OK")
</pallas_src>

<mosaic_0001>
module attributes {stable_mosaic.version = 11 : i64} {
  func.func @deepant_kernel(%arg0: i32, %arg1: memref<8x128xf32, #tpu.memory_space<vmem>>, %arg2: memref<16x8xf32, #tpu.memory_space<vmem>>, %arg3: memref<16x1xf32, #tpu.memory_space<vmem>>, %arg4: memref<16x16xf32, #tpu.memory_space<vmem>>, %arg5: memref<16x1xf32, #tpu.memory_space<vmem>>, %arg6: memref<40x16xf32, #tpu.memory_space<vmem>>, %arg7: memref<40x1xf32, #tpu.memory_space<vmem>>, %arg8: memref<4x40xf32, #tpu.memory_space<vmem>>, %arg9: memref<4x1xf32, #tpu.memory_space<vmem>>, %arg10: memref<4x128xf32, #tpu.memory_space<vmem>>) attributes {dimension_semantics = [#tpu.dimension_semantics<parallel>], iteration_bounds = array<i64: 1>, scalar_prefetch = 0 : i64, scratch_operands = 0 : i64, tpu.core_type = #tpu.core_type<tc>, window_params = [{transform_indices = @transform_0, window_bounds = array<i64: 8, 128>}, {pipeline_mode = #tpu.pipeline_mode<synchronous>, transform_indices = @transform_1, window_bounds = array<i64: 16, 8>}, {pipeline_mode = #tpu.pipeline_mode<synchronous>, transform_indices = @transform_2, window_bounds = array<i64: 16, 1>}, {pipeline_mode = #tpu.pipeline_mode<synchronous>, transform_indices = @transform_3, window_bounds = array<i64: 16, 16>}, {pipeline_mode = #tpu.pipeline_mode<synchronous>, transform_indices = @transform_4, window_bounds = array<i64: 16, 1>}, {pipeline_mode = #tpu.pipeline_mode<synchronous>, transform_indices = @transform_5, window_bounds = array<i64: 40, 16>}, {pipeline_mode = #tpu.pipeline_mode<synchronous>, transform_indices = @transform_6, window_bounds = array<i64: 40, 1>}, {pipeline_mode = #tpu.pipeline_mode<synchronous>, transform_indices = @transform_7, window_bounds = array<i64: 4, 40>}, {pipeline_mode = #tpu.pipeline_mode<synchronous>, transform_indices = @transform_8, window_bounds = array<i64: 4, 1>}, {transform_indices = @transform_9, window_bounds = array<i64: 4, 128>}]} {
    %c0 = arith.constant 0 : index
    %c0_0 = arith.constant 0 : index
    %0 = vector.load %arg1[%c0, %c0_0] : memref<8x128xf32, #tpu.memory_space<vmem>>, vector<8x128xf32>
    %c0_1 = arith.constant 0 : index
    %c0_2 = arith.constant 0 : index
    %1 = vector.load %arg2[%c0_1, %c0_2] : memref<16x8xf32, #tpu.memory_space<vmem>>, vector<16x8xf32>
    %cst = arith.constant dense<0.000000e+00> : vector<16x128xf32>
    %2 = tpu.matmul %1, %0, %cst {dimension_numbers = #tpu.dot_dimension_numbers<[1], [0], [0], [1], [0, 0, 1, 1], [], []>} : vector<16x8xf32>, vector<8x128xf32>, vector<16x128xf32> -> vector<16x128xf32>
    %c0_3 = arith.constant 0 : index
    %c0_4 = arith.constant 0 : index
    %3 = vector.load %arg3[%c0_3, %c0_4] : memref<16x1xf32, #tpu.memory_space<vmem>>, vector<16x1xf32>
    %4 = vector.broadcast %3 : vector<16x1xf32> to vector<16x128xf32>
    %5 = arith.addf %2, %4 : vector<16x128xf32>
    %cst_5 = arith.constant 0.000000e+00 : f32
    %6 = vector.broadcast %cst_5 : f32 to vector<16x128xf32>
    %7 = arith.maximumf %5, %6 : vector<16x128xf32>
    %c0_6 = arith.constant 0 : index
    %c0_7 = arith.constant 0 : index
    %8 = vector.load %arg4[%c0_6, %c0_7] : memref<16x16xf32, #tpu.memory_space<vmem>>, vector<16x16xf32>
    %cst_8 = arith.constant dense<0.000000e+00> : vector<16x128xf32>
    %9 = tpu.matmul %8, %7, %cst_8 {dimension_numbers = #tpu.dot_dimension_numbers<[1], [0], [0], [1], [0, 0, 1, 1], [], []>} : vector<16x16xf32>, vector<16x128xf32>, vector<16x128xf32> -> vector<16x128xf32>
    %c0_9 = arith.constant 0 : index
    %c0_10 = arith.constant 0 : index
    %10 = vector.load %arg5[%c0_9, %c0_10] : memref<16x1xf32, #tpu.memory_space<vmem>>, vector<16x1xf32>
    %11 = vector.broadcast %10 : vector<16x1xf32> to vector<16x128xf32>
    %12 = arith.addf %9, %11 : vector<16x128xf32>
    %cst_11 = arith.constant 0.000000e+00 : f32
    %13 = vector.broadcast %cst_11 : f32 to vector<16x128xf32>
    %14 = arith.maximumf %12, %13 : vector<16x128xf32>
    %c0_12 = arith.constant 0 : index
    %c0_13 = arith.constant 0 : index
    %15 = vector.load %arg6[%c0_12, %c0_13] : memref<40x16xf32, #tpu.memory_space<vmem>>, vector<40x16xf32>
    %cst_14 = arith.constant dense<0.000000e+00> : vector<40x128xf32>
    %16 = tpu.matmul %15, %14, %cst_14 {dimension_numbers = #tpu.dot_dimension_numbers<[1], [0], [0], [1], [0, 0, 1, 1], [], []>} : vector<40x16xf32>, vector<16x128xf32>, vector<40x128xf32> -> vector<40x128xf32>
    %c0_15 = arith.constant 0 : index
    %c0_16 = arith.constant 0 : index
    %17 = vector.load %arg7[%c0_15, %c0_16] : memref<40x1xf32, #tpu.memory_space<vmem>>, vector<40x1xf32>
    %18 = vector.broadcast %17 : vector<40x1xf32> to vector<40x128xf32>
    %19 = arith.addf %16, %18 : vector<40x128xf32>
    %cst_17 = arith.constant 0.000000e+00 : f32
    %20 = vector.broadcast %cst_17 : f32 to vector<40x128xf32>
    %21 = arith.maximumf %19, %20 : vector<40x128xf32>
    %c0_18 = arith.constant 0 : index
    %c0_19 = arith.constant 0 : index
    %22 = vector.load %arg8[%c0_18, %c0_19] : memref<4x40xf32, #tpu.memory_space<vmem>>, vector<4x40xf32>
    %cst_20 = arith.constant dense<0.000000e+00> : vector<4x128xf32>
    %23 = tpu.matmul %22, %21, %cst_20 {dimension_numbers = #tpu.dot_dimension_numbers<[1], [0], [0], [1], [0, 0, 1, 1], [], []>} : vector<4x40xf32>, vector<40x128xf32>, vector<4x128xf32> -> vector<4x128xf32>
    %c0_21 = arith.constant 0 : index
    %c0_22 = arith.constant 0 : index
    %24 = vector.load %arg9[%c0_21, %c0_22] : memref<4x1xf32, #tpu.memory_space<vmem>>, vector<4x1xf32>
    %25 = vector.broadcast %24 : vector<4x1xf32> to vector<4x128xf32>
    %26 = arith.addf %23, %25 : vector<4x128xf32>
    %c0_23 = arith.constant 0 : index
    %c0_24 = arith.constant 0 : index
    %27 = vector.load %arg10[%c0_23, %c0_24] : memref<4x128xf32, #tpu.memory_space<vmem>>, vector<4x128xf32>
    tpu.vector_store %arg10[%c0_23, %c0_24], %26 {strides = array<i32>} : memref<4x128xf32, #tpu.memory_space<vmem>>, vector<4x128xf32>,
    return
  }
  func.func @transform_0(%arg0: i32) -> (i32, i32) {
    %c0_i32 = arith.constant 0 : i32
    %c0_i32_0 = arith.constant 0 : i32
    return %c0_i32, %arg0 : i32, i32
  }
  func.func @transform_1(%arg0: i32) -> (i32, i32) {
    %c0_i32 = arith.constant 0 : i32
    %c0_i32_0 = arith.constant 0 : i32
    %c0_i32_1 = arith.constant 0 : i32
    return %c0_i32, %c0_i32_0 : i32, i32
  }
  func.func @transform_2(%arg0: i32) -> (i32, i32) {
    %c0_i32 = arith.constant 0 : i32
    %c0_i32_0 = arith.constant 0 : i32
    %c0_i32_1 = arith.constant 0 : i32
    return %c0_i32, %c0_i32_0 : i32, i32
  }
  func.func @transform_3(%arg0: i32) -> (i32, i32) {
    %c0_i32 = arith.constant 0 : i32
    %c0_i32_0 = arith.constant 0 : i32
    %c0_i32_1 = arith.constant 0 : i32
    return %c0_i32, %c0_i32_0 : i32, i32
  }
  func.func @transform_4(%arg0: i32) -> (i32, i32) {
    %c0_i32 = arith.constant 0 : i32
    %c0_i32_0 = arith.constant 0 : i32
    %c0_i32_1 = arith.constant 0 : i32
    return %c0_i32, %c0_i32_0 : i32, i32
  }
  func.func @transform_5(%arg0: i32) -> (i32, i32) {
    %c0_i32 = arith.constant 0 : i32
    %c0_i32_0 = arith.constant 0 : i32
    %c0_i32_1 = arith.constant 0 : i32
    return %c0_i32, %c0_i32_0 : i32, i32
  }
  func.func @transform_6(%arg0: i32) -> (i32, i32) {
    %c0_i32 = arith.constant 0 : i32
    %c0_i32_0 = arith.constant 0 : i32
    %c0_i32_1 = arith.constant 0 : i32
    return %c0_i32, %c0_i32_0 : i32, i32
  }
  func.func @transform_7(%arg0: i32) -> (i32, i32) {
    %c0_i32 = arith.constant 0 : i32
    %c0_i32_0 = arith.constant 0 : i32
    %c0_i32_1 = arith.constant 0 : i32
    return %c0_i32, %c0_i32_0 : i32, i32
  }
  func.func @transform_8(%arg0: i32) -> (i32, i32) {
    %c0_i32 = arith.constant 0 : i32
    %c0_i32_0 = arith.constant 0 : i32
    %c0_i32_1 = arith.constant 0 : i32
    return %c0_i32, %c0_i32_0 : i32, i32
  }
  func.func @transform_9(%arg0: i32) -> (i32, i32) {
    %c0_i32 = arith.constant 0 : i32
    %c0_i32_0 = arith.constant 0 : i32
    return %c0_i32, %arg0 : i32, i32
  }
}

</mosaic_0001>

<llo_original>
// kernel: tpu_custom_call.1
$region0: #{tpu_custom_call.1}
  #allocation0 [shape = 'u32[]', space=smem, size = 0x4, offset = 0x4, fixed_abs, tag = 'smem constant byte address 0x4 - core index']
  #allocation1 [shape = 'u32[144,128]{1,0:T(1,128)}', space=vmem, size = 0x12000, scoped, tag = 'internal scratch']
  %s0 = inlined_call_operand.vmem [shape: f32[8,128], index: 0, kind: input, shape index: {}]
  %s1 = inlined_call_operand.vmem [shape: f32[16,8], index: 1, kind: input, shape index: {}]
  %s2 = inlined_call_operand.vmem [shape: f32[16,1], index: 2, kind: input, shape index: {}]
  %s3 = inlined_call_operand.vmem [shape: f32[16,16], index: 3, kind: input, shape index: {}]
  %s4 = inlined_call_operand.vmem [shape: f32[16,1], index: 4, kind: input, shape index: {}]
  %s5 = inlined_call_operand.vmem [shape: f32[40,16], index: 5, kind: input, shape index: {}]
  %s6 = inlined_call_operand.vmem [shape: f32[40,1], index: 6, kind: input, shape index: {}]
  %s7 = inlined_call_operand.vmem [shape: f32[4,40], index: 7, kind: input, shape index: {}]
  %s8 = inlined_call_operand.vmem [shape: f32[4,1], index: 8, kind: input, shape index: {}]
  %s9 = inlined_call_operand.hbm [shape: f32[4,128], index: 9, kind: output, shape index: {}]
  %s10 = sld [smem:[#allocation0]]
  $region46: #{tpu_custom_call.1} parent=0
    _
  %s12 = ssub.s32 1, %s10
  %s13 = scalar_select 0, %s12, %s10
  $region1: #{tpu_custom_call.1} parent=0
    #allocation2 [shape = 'u8[2048]{0}', space=vmem, size = 0x800, scoped, tag = 'output window, operand 0, single buffered']
    #allocation3 [shape = 's32[1]{0}', space=sflag, size = 0x4, scoped, tag = 'scoped memory for tpu_custom_call.1']
    %14 = vsyncpa [#allocation3], 0
    // Predicated region
    $region2: #{tpu_custom_call.1} parent=1 // pred_check
      _
    $region3: #{tpu_custom_call.1} parent=1 // pred_check_branch
      %16 = sbr.rel (0) target = $region5
    $region4: #{tpu_custom_call.1} parent=1 // pred_region
      _
    $region5: #{tpu_custom_call.1} parent=1 // pred_fallthru
      _
    // Predicated region
    $region6: #{tpu_custom_call.1} parent=1 // pred_check
      _
    $region7: #{tpu_custom_call.1} parent=1 // pred_check_branch
      %18 = sbr.rel (0) target = $region9
    $region8: #{tpu_custom_call.1} parent=1 // pred_region
      _
    $region9: #{tpu_custom_call.1} parent=1 // pred_fallthru
      _
    // Predicated region
    $region10: #{tpu_custom_call.1} parent=1 // pred_check
      _
    $region11: #{tpu_custom_call.1} parent=1 // pred_check_branch
      %20 = sbr.rel (0) target = $region13
    $region12: #{tpu_custom_call.1} parent=1 // pred_region
      _
    $region13: #{tpu_custom_call.1} parent=1 // pred_fallthru
      _
    // Predicated region
    $region14: #{tpu_custom_call.1} parent=1 // pred_check
      _
    $region15: #{tpu_custom_call.1} parent=1 // pred_check_branch
      %22 = sbr.rel (0) target = $region17
    $region16: #{tpu_custom_call.1} parent=1 // pred_region
      _
    $region17: #{tpu_custom_call.1} parent=1 // pred_fallthru
      _
    // Predicated region
    $region18: #{tpu_custom_call.1} parent=1 // pred_check
      _
    $region19: #{tpu_custom_call.1} parent=1 // pred_check_branch
      %24 = sbr.rel (0) target = $region21
    $region20: #{tpu_custom_call.1} parent=1 // pred_region
      _
    $region21: #{tpu_custom_call.1} parent=1 // pred_fallthru
      _
    // Predicated region
    $region22: #{tpu_custom_call.1} parent=1 // pred_check
      _
    $region23: #{tpu_custom_call.1} parent=1 // pred_check_branch
      %26 = sbr.rel (0) target = $region25
    $region24: #{tpu_custom_call.1} parent=1 // pred_region
      _
    $region25: #{tpu_custom_call.1} parent=1 // pred_fallthru
      _
    // Predicated region
    $region26: #{tpu_custom_call.1} parent=1 // pred_check
      _
    $region27: #{tpu_custom_call.1} parent=1 // pred_check_branch
      %28 = sbr.rel (0) target = $region29
    $region28: #{tpu_custom_call.1} parent=1 // pred_region
      _
    $region29: #{tpu_custom_call.1} parent=1 // pred_fallthru
      _
    // Predicated region
    $region30: #{tpu_custom_call.1} parent=1 // pred_check
      _
    $region31: #{tpu_custom_call.1} parent=1 // pred_check_branch
      %30 = sbr.rel (0) target = $region33
    $region32: #{tpu_custom_call.1} parent=1 // pred_region
      _
    $region33: #{tpu_custom_call.1} parent=1 // pred_fallthru
      _
    // Predicated region
    $region34: #{tpu_custom_call.1} parent=1 // pred_check
      _
    $region35: #{tpu_custom_call.1} parent=1 // pred_check_branch
      %32 = sbr.rel (0) target = $region37
    $region36: #{tpu_custom_call.1} parent=1 // pred_region
      _
    $region37: #{tpu_custom_call.1} parent=1 // pred_fallthru
      _
    %v33 = vld [vmem:[%s0] sm:$0xff]
    %v34 = vld [vmem:[%s1] sm:$0xff]
    %v35 = vld [vmem:[%s1 + $0x8] sm:$0xff]
    %v36 = vld [vmem:[%s2] sm:$0xff]
    %v37 = vld [vmem:[%s2 + $0x8] sm:$0xff]
    %39 = vset.pattern.permute.xlu0 0
    %40 = vperm.xlu0 %39, %v36
    %v41 = vpop.permute.xlu0 %40
    %44 = vset.pattern.permute.xlu0 0
    %45 = vperm.xlu0 %44, %v37
    %v46 = vpop.permute.xlu0 %45
    %vm48 = vcmask 64512
    %v50 = vsel %vm48, %v34, 0
    %v53 = vsel %vm48, %v35, 0
    %55 = vmatprep.subr.mxu0 0.0
    %56 = vmatpush1.msra.mxu0 %v33
    %57 = vmatprep.subr.mxu0 0.0
    %58 = vmatpush1.msra.mxu0 0.0
    %59 = vmatprep.subr.mxu0 0.0
    %60 = vmatpush1.msra.mxu0 0.0
    %61 = vmatprep.subr.mxu0 0.0
    %62 = vmatpush1.msra.mxu0 0.0
    %63 = vmatprep.subr.mxu0 0.0
    %64 = vmatpush1.msra.mxu0 0.0
    %65 = vmatprep.subr.mxu0 0.0
    %66 = vmatpush1.msra.mxu0 0.0
    %67 = vmatprep.subr.mxu0 0.0
    %68 = vmatpush1.msra.mxu0 0.0
    %69 = vmatprep.subr.mxu0 0.0
    %70 = vmatpush1.msra.mxu0 0.0
    %71 = vmatprep.subr.mxu0 0.0
    %72 = vmatpush1.msra.mxu0 0.0
    %73 = vmatprep.subr.mxu0 0.0
    %74 = vmatpush1.msra.mxu0 0.0
    %75 = vmatprep.subr.mxu0 0.0
    %76 = vmatpush1.msra.mxu0 0.0
    %77 = vmatprep.subr.mxu0 0.0
    %78 = vmatpush1.msra.mxu0 0.0
    %79 = vmatprep.subr.mxu0 0.0
    %80 = vmatpush1.msra.mxu0 0.0
    %81 = vmatprep.subr.mxu0 0.0
    %82 = vmatpush1.msra.mxu0 0.0
    %83 = vmatprep.subr.mxu0 0.0
    %84 = vmatpush1.msra.mxu0 0.0
    %85 = vmatprep.subr.mxu0 0.0
    %86 = vmatpush1.msra.mxu0 0.0
    %87 = vmatprep.subr.mxu0 0.0
    %88 = vmatpush1.msra.mxu0 0.0
    %89 = vmatprep.subr.mxu0 0.0
    %90 = vmatpush1.msra.mxu0 0.0
    %91 = vmatprep.subr.mxu0 0.0
    %92 = vmatpush1.msra.mxu0 0.0
    %93 = vmatprep.subr.mxu0 0.0
    %94 = vmatpush1.msra.mxu0 0.0
    %95 = vmatprep.subr.mxu0 0.0
    %96 = vmatpush1.msra.mxu0 0.0
    %97 = vmatprep.subr.mxu0 0.0
    %98 = vmatpush1.msra.mxu0 0.0
    %99 = vmatprep.subr.mxu0 0.0
    %100 = vmatpush1.msra.mxu0 0.0
    %101 = vmatprep.subr.mxu0 0.0
    %102 = vmatpush1.msra.mxu0 0.0
    %103 = vmatprep.subr.mxu0 0.0
    %104 = vmatpush1.msra.mxu0 0.0
    %105 = vmatprep.subr.mxu0 0.0
    %106 = vmatpush1.msra.mxu0 0.0
    %107 = vmatprep.subr.mxu0 0.0
    %108 = vmatpush1.msra.mxu0 0.0
    %109 = vmatprep.subr.mxu0 0.0
    %110 = vmatpush1.msra.mxu0 0.0
    %111 = vmatprep.subr.mxu0 0.0
    %112 = vmatpush1.msra.mxu0 0.0
    %113 = vmatprep.subr.mxu0 0.0
    %114 = vmatpush1.msra.mxu0 0.0
    %115 = vmatprep.subr.mxu0 0.0
    %116 = vmatpush1.msra.mxu0 0.0
    %117 = vmatprep.subr.mxu0 0.0
    %118 = vmatpush1.msra.mxu0 0.0
    %119 = vmatprep.mubr.f32.mxu0 0.0
    %120 = vmatmul.mubr.f32.gmra.mrb[0].mxu0 %v50
    %v121 = vpop.f32.mrb[0].mxu0
    %v122 = vadd.f32 %v41, %v121
    %v123 = vpop.f32.mrb[0].mxu0
    %124 = vmatprep.mubr.f32.mxu0 0.0
    %125 = vmatmul.mubr.f32.gmra.mrb[0].mxu0 %v53
    %v126 = vpop.f32.mrb[0].mxu0
    %v127 = vadd.f32 %v46, %v126
    %v128 = vpop.f32.mrb[0].mxu0
    %129 = vdwg.mxu0
    %v130 = vmax.f32 %v122, 0.0
    %v131 = vmax.f32 %v127, 0.0
    %v132 = vld [vmem:[%s3] sm:$0xff]
    %v133 = vld [vmem:[%s3 + $0x8] sm:$0xff]
    %v134 = vld [vmem:[%s4] sm:$0xff]
    %v135 = vld [vmem:[%s4 + $0x8] sm:$0xff]
    %137 = vset.pattern.permute.xlu0 0
    %138 = vperm.xlu0 %137, %v134
    %v139 = vpop.permute.xlu0 %138
    %142 = vset.pattern.permute.xlu0 0
    %143 = vperm.xlu0 %142, %v135
    %v144 = vpop.permute.xlu0 %143
    %vm146 = vcmask 130048
    %v148 = vsel %vm146, %v132, 0
    %v151 = vsel %vm146, %v133, 0
    %153 = vmatprep.subr.mxu0 0.0
    %154 = vmatpush1.msra.mxu0 %v130
    %155 = vmatprep.subr.mxu0 0.0
    %156 = vmatpush1.msra.mxu0 %v131
    %157 = vmatprep.subr.mxu0 0.0
    %158 = vmatpush1.msra.mxu0 0.0
    %159 = vmatprep.subr.mxu0 0.0
    %160 = vmatpush1.msra.mxu0 0.0
    %161 = vmatprep.subr.mxu0 0.0
    %162 = vmatpush1.msra.mxu0 0.0
    %163 = vmatprep.subr.mxu0 0.0
    %164 = vmatpush1.msra.mxu0 0.0
    %165 = vmatprep.subr.mxu0 0.0
    %166 = vmatpush1.msra.mxu0 0.0
    %167 = vmatprep.subr.mxu0 0.0
    %168 = vmatpush1.msra.mxu0 0.0
    %169 = vmatprep.subr.mxu0 0.0
    %170 = vmatpush1.msra.mxu0 0.0
    %171 = vmatprep.subr.mxu0 0.0
    %172 = vmatpush1.msra.mxu0 0.0
    %173 = vmatprep.subr.mxu0 0.0
    %174 = vmatpush1.msra.mxu0 0.0
    %175 = vmatprep.subr.mxu0 0.0
    %176 = vmatpush1.msra.mxu0 0.0
    %177 = vmatprep.subr.mxu0 0.0
    %178 = vmatpush1.msra.mxu0 0.0
    %179 = vmatprep.subr.mxu0 0.0
    %180 = vmatpush1.msra.mxu0 0.0
    %181 = vmatprep.subr.mxu0 0.0
    %182 = vmatpush1.msra.mxu0 0.0
    %183 = vmatprep.subr.mxu0 0.0
    %184 = vmatpush1.msra.mxu0 0.0
    %185 = vmatprep.subr.mxu0 0.0
    %186 = vmatpush1.msra.mxu0 0.0
    %187 = vmatprep.subr.mxu0 0.0
    %188 = vmatpush1.msra.mxu0 0.0
    %189 = vmatprep.subr.mxu0 0.0
    %190 = vmatpush1.msra.mxu0 0.0
    %191 = vmatprep.subr.mxu0 0.0
    %192 = vmatpush1.msra.mxu0 0.0
    %193 = vmatprep.subr.mxu0 0.0
    %194 = vmatpush1.msra.mxu0 0.0
    %195 = vmatprep.subr.mxu0 0.0
    %196 = vmatpush1.msra.mxu0 0.0
    %197 = vmatprep.subr.mxu0 0.0
    %198 = vmatpush1.msra.mxu0 0.0
    %199 = vmatprep.subr.mxu0 0.0
    %200 = vmatpush1.msra.mxu0 0.0
    %201 = vmatprep.subr.mxu0 0.0
    %202 = vmatpush1.msra.mxu0 0.0
    %203 = vmatprep.subr.mxu0 0.0
    %204 = vmatpush1.msra.mxu0 0.0
    %205 = vmatprep.subr.mxu0 0.0
    %206 = vmatpush1.msra.mxu0 0.0
    %207 = vmatprep.subr.mxu0 0.0
    %208 = vmatpush1.msra.mxu0 0.0
    %209 = vmatprep.subr.mxu0 0.0
    %210 = vmatpush1.msra.mxu0 0.0
    %211 = vmatprep.subr.mxu0 0.0
    %212 = vmatpush1.msra.mxu0 0.0
    %213 = vmatprep.subr.mxu0 0.0
    %214 = vmatpush1.msra.mxu0 0.0
    %215 = vmatprep.subr.mxu0 0.0
    %216 = vmatpush1.msra.mxu0 0.0
    %217 = vmatprep.mubr.f32.mxu0 0.0
    %218 = vmatmul.mubr.f32.gmra.mrb[0].mxu0 %v148
    %v219 = vpop.f32.mrb[0].mxu0
    %v220 = vadd.f32 %v139, %v219
    %v221 = vpop.f32.mrb[0].mxu0
    %222 = vmatprep.mubr.f32.mxu0 0.0
    %223 = vmatmul.mubr.f32.gmra.mrb[0].mxu0 %v151
    %v224 = vpop.f32.mrb[0].mxu0
    %v225 = vadd.f32 %v144, %v224
    %v226 = vpop.f32.mrb[0].mxu0
    %227 = vdwg.mxu0
    %v228 = vmax.f32 %v220, 0.0
    %v229 = vmax.f32 %v225, 0.0
    %v230 = vld [vmem:[%s5] sm:$0xff]
    %v231 = vld [vmem:[%s5 + $0x8] sm:$0xff]
    %v232 = vld [vmem:[%s5 + $0x10] sm:$0xff]
    %v233 = vld [vmem:[%s5 + $0x18] sm:$0xff]
    %v234 = vld [vmem:[%s5 + $0x20] sm:$0xff]
    %v235 = vld [vmem:[%s6] sm:$0xff]
    %v236 = vld [vmem:[%s6 + $0x8] sm:$0xff]
    %v237 = vld [vmem:[%s6 + $0x10] sm:$0xff]
    %v238 = vld [vmem:[%s6 + $0x18] sm:$0xff]
    %v239 = vld [vmem:[%s6 + $0x20] sm:$0xff]
    %241 = vset.pattern.permute.xlu0 0
    %242 = vperm.xlu0 %241, %v235
    %v243 = vpop.permute.xlu0 %242
    %246 = vset.pattern.permute.xlu0 0
    %247 = vperm.xlu0 %246, %v236
    %v248 = vpop.permute.xlu0 %247
    %251 = vset.pattern.permute.xlu0 0
    %252 = vperm.xlu0 %251, %v237
    %v253 = vpop.permute.xlu0 %252
    %256 = vset.pattern.permute.xlu0 0
    %257 = vperm.xlu0 %256, %v238
    %v258 = vpop.permute.xlu0 %257
    %261 = vset.pattern.permute.xlu0 0
    %262 = vperm.xlu0 %261, %v239
    %v263 = vpop.permute.xlu0 %262
    %v266 = vsel %vm146, %v230, 0
    %v269 = vsel %vm146, %v231, 0
    %v272 = vsel %vm146, %v232, 0
    %v275 = vsel %vm146, %v233, 0
    %v278 = vsel %vm146, %v234, 0
    %280 = vmatprep.subr.mxu0 0.0
    %281 = vmatpush1.msra.mxu0 %v228
    %282 = vmatprep.subr.mxu0 0.0
    %283 = vmatpush1.msra.mxu0 %v229
    %284 = vmatprep.subr.mxu0 0.0
    %285 = vmatpush1.msra.mxu0 0.0
    %286 = vmatprep.subr.mxu0 0.0
    %287 = vmatpush1.msra.mxu0 0.0
    %288 = vmatprep.subr.mxu0 0.0
    %289 = vmatpush1.msra.mxu0 0.0
    %290 = vmatprep.subr.mxu0 0.0
    %291 = vmatpush1.msra.mxu0 0.0
    %292 = vmatprep.subr.mxu0 0.0
    %293 = vmatpush1.msra.mxu0 0.0
    %294 = vmatprep.subr.mxu0 0.0
    %295 = vmatpush1.msra.mxu0 0.0
    %296 = vmatprep.subr.mxu0 0.0
    %297 = vmatpush1.msra.mxu0 0.0
    %298 = vmatprep.subr.mxu0 0.0
    %299 = vmatpush1.msra.mxu0 0.0
    %300 = vmatprep.subr.mxu0 0.0
    %301 = vmatpush1.msra.mxu0 0.0
    %302 = vmatprep.subr.mxu0 0.0
    %303 = vmatpush1.msra.mxu0 0.0
    %304 = vmatprep.subr.mxu0 0.0
    %305 = vmatpush1.msra.mxu0 0.0
    %306 = vmatprep.subr.mxu0 0.0
    %307 = vmatpush1.msra.mxu0 0.0
    %308 = vmatprep.subr.mxu0 0.0
    %309 = vmatpush1.msra.mxu0 0.0
    %310 = vmatprep.subr.mxu0 0.0
    %311 = vmatpush1.msra.mxu0 0.0
    %312 = vmatprep.subr.mxu0 0.0
    %313 = vmatpush1.msra.mxu0 0.0
    %314 = vmatprep.subr.mxu0 0.0
    %315 = vmatpush1.msra.mxu0 0.0
    %316 = vmatprep.subr.mxu0 0.0
    %317 = vmatpush1.msra.mxu0 0.0
    %318 = vmatprep.subr.mxu0 0.0
    %319 = vmatpush1.msra.mxu0 0.0
    %320 = vmatprep.subr.mxu0 0.0
    %321 = vmatpush1.msra.mxu0 0.0
    %322 = vmatprep.subr.mxu0 0.0
    %323 = vmatpush1.msra.mxu0 0.0
    %324 = vmatprep.subr.mxu0 0.0
    %325 = vmatpush1.msra.mxu0 0.0
    %326 = vmatprep.subr.mxu0 0.0
    %327 = vmatpush1.msra.mxu0 0.0
    %328 = vmatprep.subr.mxu0 0.0
    %329 = vmatpush1.msra.mxu0 0.0
    %330 = vmatprep.subr.mxu0 0.0
    %331 = vmatpush1.msra.mxu0 0.0
    %332 = vmatprep.subr.mxu0 0.0
    %333 = vmatpush1.msra.mxu0 0.0
    %334 = vmatprep.subr.mxu0 0.0
    %335 = vmatpush1.msra.mxu0 0.0
    %336 = vmatprep.subr.mxu0 0.0
    %337 = vmatpush1.msra.mxu0 0.0
    %338 = vmatprep.subr.mxu0 0.0
    %339 = vmatpush1.msra.mxu0 0.0
    %340 = vmatprep.subr.mxu0 0.0
    %341 = vmatpush1.msra.mxu0 0.0
    %342 = vmatprep.subr.mxu0 0.0
    %343 = vmatpush1.msra.mxu0 0.0
    %344 = vmatprep.mubr.f32.mxu0 0.0
    %345 = vmatmul.mubr.f32.gmra.mrb[0].mxu0 %v266
    %v346 = vpop.f32.mrb[0].mxu0
    %v347 = vadd.f32 %v243, %v346
    %v348 = vpop.f32.mrb[0].mxu0
    %349 = vmatprep.mubr.f32.mxu0 0.0
    %350 = vmatmul.mubr.f32.gmra.mrb[0].mxu0 %v269
    %v351 = vpop.f32.mrb[0].mxu0
    %v352 = vadd.f32 %v248, %v351
    %v353 = vpop.f32.mrb[0].mxu0
    %354 = vmatprep.mubr.f32.mxu0 0.0
    %355 = vmatmul.mubr.f32.gmra.mrb[0].mxu0 %v272
    %v356 = vpop.f32.mrb[0].mxu0
    %v357 = vadd.f32 %v253, %v356
    %v358 = vpop.f32.mrb[0].mxu0
    %359 = vmatprep.mubr.f32.mxu0 0.0
    %360 = vmatmul.mubr.f32.gmra.mrb[0].mxu0 %v275
    %v361 = vpop.f32.mrb[0].mxu0
    %v362 = vadd.f32 %v258, %v361
    %v363 = vpop.f32.mrb[0].mxu0
    %364 = vmatprep.mubr.f32.mxu0 0.0
    %365 = vmatmul.mubr.f32.gmra.mrb[0].mxu0 %v278
    %v366 = vpop.f32.mrb[0].mxu0
    %v367 = vadd.f32 %v263, %v366
    %v368 = vpop.f32.mrb[0].mxu0
    %369 = vdwg.mxu0
    %v370 = vmax.f32 %v347, 0.0
    %v371 = vmax.f32 %v352, 0.0
    %v372 = vmax.f32 %v357, 0.0
    %v373 = vmax.f32 %v362, 0.0
    %v374 = vmax.f32 %v367, 0.0
    %v375 = vld [vmem:[%s7] sm:$0xf]
    %v376 = vld [vmem:[%s8] sm:$0xf]
    %378 = vset.pattern.permute.xlu0 0
    %379 = vperm.xlu0 %378, %v376
    %v380 = vpop.permute.xlu0 %379
    %vm382 = vcmask 326656
    %v384 = vsel %vm382, %v375, 0
    %386 = vmatprep.subr.mxu0 0.0
    %387 = vmatpush1.msra.mxu0 %v370
    %388 = vmatprep.subr.mxu0 0.0
    %389 = vmatpush1.msra.mxu0 %v371
    %390 = vmatprep.subr.mxu0 0.0
    %391 = vmatpush1.msra.mxu0 %v372
    %392 = vmatprep.subr.mxu0 0.0
    %393 = vmatpush1.msra.mxu0 %v373
    %394 = vmatprep.subr.mxu0 0.0
    %395 = vmatpush1.msra.mxu0 %v374
    %396 = vmatprep.subr.mxu0 0.0
    %397 = vmatpush1.msra.mxu0 0.0
    %398 = vmatprep.subr.mxu0 0.0
    %399 = vmatpush1.msra.mxu0 0.0
    %400 = vmatprep.subr.mxu0 0.0
    %401 = vmatpush1.msra.mxu0 0.0
    %402 = vmatprep.subr.mxu0 0.0
    %403 = vmatpush1.msra.mxu0 0.0
    %404 = vmatprep.subr.mxu0 0.0
    %405 = vmatpush1.msra.mxu0 0.0
    %406 = vmatprep.subr.mxu0 0.0
    %407 = vmatpush1.msra.mxu0 0.0
    %408 = vmatprep.subr.mxu0 0.0
    %409 = vmatpush1.msra.mxu0 0.0
    %410 = vmatprep.subr.mxu0 0.0
    %411 = vmatpush1.msra.mxu0 0.0
    %412 = vmatprep.subr.mxu0 0.0
    %413 = vmatpush1.msra.mxu0 0.0
    %414 = vmatprep.subr.mxu0 0.0
    %415 = vmatpush1.msra.mxu0 0.0
    %416 = vmatprep.subr.mxu0 0.0
    %417 = vmatpush1.msra.mxu0 0.0
    %418 = vmatprep.subr.mxu0 0.0
    %419 = vmatpush1.msra.mxu0 0.0
    %420 = vmatprep.subr.mxu0 0.0
    %421 = vmatpush1.msra.mxu0 0.0
    %422 = vmatprep.subr.mxu0 0.0
    %423 = vmatpush1.msra.mxu0 0.0
    %424 = vmatprep.subr.mxu0 0.0
    %425 = vmatpush1.msra.mxu0 0.0
    %426 = vmatprep.subr.mxu0 0.0
    %427 = vmatpush1.msra.mxu0 0.0
    %428 = vmatprep.subr.mxu0 0.0
    %429 = vmatpush1.msra.mxu0 0.0
    %430 = vmatprep.subr.mxu0 0.0
    %431 = vmatpush1.msra.mxu0 0.0
    %432 = vmatprep.subr.mxu0 0.0
    %433 = vmatpush1.msra.mxu0 0.0
    %434 = vmatprep.subr.mxu0 0.0
    %435 = vmatpush1.msra.mxu0 0.0
    %436 = vmatprep.subr.mxu0 0.0
    %437 = vmatpush1.msra.mxu0 0.0
    %438 = vmatprep.subr.mxu0 0.0
    %439 = vmatpush1.msra.mxu0 0.0
    %440 = vmatprep.subr.mxu0 0.0
    %441 = vmatpush1.msra.mxu0 0.0
    %442 = vmatprep.subr.mxu0 0.0
    %443 = vmatpush1.msra.mxu0 0.0
    %444 = vmatprep.subr.mxu0 0.0
    %445 = vmatpush1.msra.mxu0 0.0
    %446 = vmatprep.subr.mxu0 0.0
    %447 = vmatpush1.msra.mxu0 0.0
    %448 = vmatprep.subr.mxu0 0.0
    %449 = vmatpush1.msra.mxu0 0.0
    %450 = vmatprep.mubr.f32.mxu0 0.0
    %451 = vmatmul.mubr.f32.gmra.mrb[0].mxu0 %v384
    %v452 = vpop.f32.mrb[0].mxu0
    %v453 = vadd.f32 %v380, %v452
    %v454 = vpop.f32.mrb[0].mxu0
    %455 = vdwg.mxu0
    %456 = vst [vmem:[#allocation2] sm:$0xf] %v453
    // Predicated region
    $region38: #{tpu_custom_call.1} parent=1 // pred_check
      _
    $region39: #{tpu_custom_call.1} parent=1 // pred_check_branch
      %458 = sbr.rel (0) target = $region41
    $region40: #{tpu_custom_call.1} parent=1 // pred_region
      %s460 = ssub.s32 64, 64
      %461 = vsyncadd [#allocation3], %s460
      %s463 = sshll.u32 [#allocation2], 4
      %s464 = int_to_ptr.vmem [resolvable:$true] %s463
      %466 = dma.vmem_to_hbm [thread:$0]  %s464, 64, %s9, [#allocation3]
    $region41: #{tpu_custom_call.1} parent=1 // pred_fallthru
      _
    // Predicated region
    $region42: #{tpu_custom_call.1} parent=1 // pred_check
      _
    $region43: #{tpu_custom_call.1} parent=1 // pred_check_branch
      %468 = sbr.rel (0) target = $region45
    $region44: #{tpu_custom_call.1} parent=1 // pred_region
      %469 = dma.done [#allocation3], 64
    $region45: #{tpu_custom_call.1} parent=1 // pred_fallthru
      _
    %470 = vsyncpa [#allocation3], 1

</llo_original>
